<compile_context>
chip_gen: v5e
topology: v5e:2x2
jax: 0.10.0
libtpu: 0.0.40
codegen_flags: <defaults>
</compile_context>

<pallas_src>
import functools

import jax
import jax.numpy as jnp
from jax.experimental import pallas as pl
from jax.experimental.pallas import tpu as pltpu


def _fused_scale_permute_kernel(s_ref, x_ref, o_ref, *, c_tile):
    # s_ref: (1, C)              full per-channel scale, resident for all steps
    # x_ref: (1, hw_tile, c_tile) NHWC tile, C on the lane axis
    # o_ref: (1, c_tile, hw_tile) NCHW tile, C on the sublane axis
    #
    # Process the channel tile in <=128-lane strips so each (hw, 128) slab and
    # its (128, hw) transpose fit comfortably in the vreg file (no spills).
    for off in range(0, c_tile, 128):
        w = min(128, c_tile - off)
        start = pl.program_id(1) * c_tile + off          # absolute channel base
        if c_tile % 128 == 0:
            start = pl.multiple_of(start, 128)           # aligned scale slice
        sc = s_ref[:, pl.ds(start, w)]                   # (1, w) lane-broadcast
        strip = x_ref[0, :, pl.ds(off, w)]               # (hw_tile, w) lane-dense
        y = strip * sc                                   # VPU multiply
        o_ref[0, pl.ds(off, w), :] = jnp.transpose(y).astype(o_ref.dtype)  # XLU


def _vmem_pair_budget_bytes():
    """Budget for the double-buffered (input block + output block) pair,
    derived from the device so v7x's 64 MiB VMEM is respected while v5e/v6e
    (128 MiB) keep headroom under the scoped default."""
    cap = 64 * 1024 * 1024
    try:
        info = pltpu.get_tpu_info()
        cap = getattr(info, "vmem_capacity_bytes", cap)
    except Exception:
        pass
    return max(2 * 1024 * 1024, min(cap // 8, 8 * 1024 * 1024))


def _choose_c_tile(C, N, HW, itemsize, budget_bytes):
    """Pick the channel tile: a 128-multiple divisor of C when one exists.
    Policy: (a) double-buffered in+out blocks fit the VMEM budget,
    (b) contiguous input-DMA rows stay >= ~1 KB (avoid short strided runs),
    (c) the LARGEST such tile that still leaves >= 2 total grid blocks
        (so v7x's two TensorCores both get work) -- i.e. few grid steps on
        single-TC v5e/v6e (never c_tile=128 / 6 steps for this shape)."""
    cands = [t for t in range(128, C + 1, 128) if C % t == 0]
    if not cands:
        # Odd C: the full channel dim is always a legal (and small) block.
        return C

    def pair_bytes(t):
        # 2x double-buffer x (input block + output block)
        return 4 * HW * t * itemsize

    fitting = [t for t in cands if pair_bytes(t) <= budget_bytes] or [min(cands)]
    floor = max(128, -(-1024 // itemsize))               # >= ~1 KB contiguous rows
    roomy = [t for t in fitting if t >= floor] or fitting
    multi = [t for t in roomy if N * (C // t) >= 2]      # >= 2 parallel blocks
    return max(multi) if multi else max(roomy)


def layer_scale_permute_mul(x_nhwc: jax.Array, layer_scale: jax.Array) -> jax.Array:
    """Equivalent of M.forward: out[NCHW] = layer_scale[C,1,1] * permute(x, [0,3,1,2])."""
    N, H, W, C = x_nhwc.shape
    assert layer_scale.shape == (C, 1, 1)
    HW = H * W
    x_itemsize = jnp.dtype(x_nhwc.dtype).itemsize
    out_dtype = jnp.result_type(x_nhwc.dtype, layer_scale.dtype)

    c_tile = _choose_c_tile(C, N, HW, x_itemsize, _vmem_pair_budget_bytes())
    n_c = C // c_tile

    # v7x has 2 TensorCores: if the grid would collapse to a single block
    # (N=1 and no channel split) and HW splits into legal 128-multiples,
    # add an HW axis so both cores get work and DMA can pipeline.
    if N * n_c < 2 and HW % 256 == 0:
        n_hw, hw_tile = 2, HW // 2
    else:
        n_hw, hw_tile = 1, HW

    x3d = x_nhwc.reshape(N, HW, C)                 # free view (row-major)
    scale2d = layer_scale.reshape(1, C)            # [1, C], lane-dense, ~3 KB

    bytes_accessed = (N * HW * C * x_itemsize
                      + C * jnp.dtype(layer_scale.dtype).itemsize
                      + N * C * HW * jnp.dtype(out_dtype).itemsize)

    kernel = functools.partial(_fused_scale_permute_kernel, c_tile=c_tile)

    out3d = pl.pallas_call(
        kernel,
        out_shape=jax.ShapeDtypeStruct((N, C, HW), out_dtype),
        grid_spec=pltpu.PrefetchScalarGridSpec(
            num_scalar_prefetch=0,
            grid=(N, n_c, n_hw),
            in_specs=[
                # Scale: same block index for every grid step -> fetched once,
                # stays resident in VMEM; sliced in-kernel with pl.ds.
                pl.BlockSpec((1, C), lambda n, c, h: (0, 0)),
                # Activations: NHWC tile, C lane-dense.
                pl.BlockSpec((1, hw_tile, c_tile), lambda n, c, h: (n, h, c)),
            ],
            out_specs=pl.BlockSpec((1, c_tile, hw_tile), lambda n, c, h: (n, c, h)),
        ),
        compiler_params=pltpu.CompilerParams(
            dimension_semantics=("parallel", "parallel", "parallel")),
        cost_estimate=pl.CostEstimate(
            flops=N * C * HW,
            transcendentals=0,
            bytes_accessed=bytes_accessed),
    )(scale2d, x3d)

    return out3d.reshape(N, C, H, W)


if __name__ == "__main__":
    key = jax.random.PRNGKey(0)
    k1, k2 = jax.random.split(key)

    # Shapes implied by the module: x377 ~ [1, 14, 14, 768], layer_scale ~ [768, 1, 1]
    N, H, W, C = 1, 14, 14, 768
    x377 = jax.random.normal(k1, (N, H, W, C), dtype=jnp.float32)
    layer_scale = jax.random.uniform(k2, (C, 1, 1), dtype=jnp.float32)

    out = jax.block_until_ready(layer_scale_permute_mul(x377, layer_scale))

    # reference check (plain JAX)
    ref = layer_scale.reshape(1, C, 1, 1) * jnp.transpose(x377, (0, 3, 1, 2))
    assert out.shape == (N, C, H, W)
    assert jnp.allclose(out, ref, atol=1e-6, rtol=1e-6)

    print("KERNEL_OK")
</pallas_src>

<mosaic_0001>
module attributes {stable_mosaic.version = 11 : i64} {
  func.func @_fused_scale_permute_kernel(%arg0: i32, %arg1: i32, %arg2: i32, %arg3: memref<1x768xf32, #tpu.memory_space<vmem>>, %arg4: memref<1x196x384xf32, #tpu.memory_space<vmem>>, %arg5: memref<1x384x196xf32, #tpu.memory_space<vmem>>) attributes {dimension_semantics = [#tpu.dimension_semantics<parallel>, #tpu.dimension_semantics<parallel>, #tpu.dimension_semantics<parallel>], iteration_bounds = array<i64: 1, 2, 1>, scalar_prefetch = 0 : i64, scratch_operands = 0 : i64, tpu.core_type = #tpu.core_type<tc>, window_params = [{pipeline_mode = #tpu.pipeline_mode<synchronous>, transform_indices = @transform_0, window_bounds = array<i64: 1, 768>}, {transform_indices = @transform_1, window_bounds = array<i64: 1, 196, 384>}, {transform_indices = @transform_2, window_bounds = array<i64: 1, 384, 196>}]} {
    %c384_i32 = arith.constant 384 : i32
    %0 = arith.muli %arg1, %c384_i32 : i32
    %c0_i32 = arith.constant 0 : i32
    %1 = arith.addi %0, %c0_i32 : i32
    %2 = tpu.assume_multiple %1, 128 : i32
    %c0 = arith.constant 0 : index
    %3 = arith.index_cast %2 : i32 to index
    %4 = vector.load %arg3[%c0, %3] : memref<1x768xf32, #tpu.memory_space<vmem>>, vector<1x128xf32>
    %c0_0 = arith.constant 0 : index
    %c0_1 = arith.constant 0 : index
    %c0_2 = arith.constant 0 : index
    %5 = vector.load %arg4[%c0_0, %c0_1, %c0_2] : memref<1x196x384xf32, #tpu.memory_space<vmem>>, vector<1x196x128xf32>
    %6 = vector.shape_cast %5 : vector<1x196x128xf32> to vector<196x128xf32>
    %7 = vector.broadcast %4 : vector<1x128xf32> to vector<196x128xf32>
    %8 = arith.mulf %6, %7 : vector<196x128xf32>
    %9 = tpu.transpose %8, [1, 0] : vector<196x128xf32> -> vector<128x196xf32>
    %c0_3 = arith.constant 0 : index
    %c0_4 = arith.constant 0 : index
    %c0_5 = arith.constant 0 : index
    %10 = vector.load %arg5[%c0_3, %c0_4, %c0_5] : memref<1x384x196xf32, #tpu.memory_space<vmem>>, vector<1x128x196xf32>
    %11 = vector.shape_cast %10 : vector<1x128x196xf32> to vector<128x196xf32>
    %12 = vector.shape_cast %9 : vector<128x196xf32> to vector<1x128x196xf32>
    tpu.vector_store %arg5[%c0_3, %c0_4, %c0_5], %12 {strides = array<i32>} : memref<1x384x196xf32, #tpu.memory_space<vmem>>, vector<1x128x196xf32>,
    %c384_i32_6 = arith.constant 384 : i32
    %13 = arith.muli %arg1, %c384_i32_6 : i32
    %c128_i32 = arith.constant 128 : i32
    %14 = arith.addi %13, %c128_i32 : i32
    %15 = tpu.assume_multiple %14, 128 : i32
    %c0_7 = arith.constant 0 : index
    %16 = arith.index_cast %15 : i32 to index
    %17 = vector.load %arg3[%c0_7, %16] : memref<1x768xf32, #tpu.memory_space<vmem>>, vector<1x128xf32>
    %c0_8 = arith.constant 0 : index
    %c0_9 = arith.constant 0 : index
    %c128 = arith.constant 128 : index
    %18 = vector.load %arg4[%c0_8, %c0_9, %c128] : memref<1x196x384xf32, #tpu.memory_space<vmem>>, vector<1x196x128xf32>
    %19 = vector.shape_cast %18 : vector<1x196x128xf32> to vector<196x128xf32>
    %20 = vector.broadcast %17 : vector<1x128xf32> to vector<196x128xf32>
    %21 = arith.mulf %19, %20 : vector<196x128xf32>
    %22 = tpu.transpose %21, [1, 0] : vector<196x128xf32> -> vector<128x196xf32>
    %c0_10 = arith.constant 0 : index
    %c128_11 = arith.constant 128 : index
    %c0_12 = arith.constant 0 : index
    %23 = vector.load %arg5[%c0_10, %c128_11, %c0_12] : memref<1x384x196xf32, #tpu.memory_space<vmem>>, vector<1x128x196xf32>
    %24 = vector.shape_cast %23 : vector<1x128x196xf32> to vector<128x196xf32>
    %25 = vector.shape_cast %22 : vector<128x196xf32> to vector<1x128x196xf32>
    tpu.vector_store %arg5[%c0_10, %c128_11, %c0_12], %25 {strides = array<i32>} : memref<1x384x196xf32, #tpu.memory_space<vmem>>, vector<1x128x196xf32>,
    %c384_i32_13 = arith.constant 384 : i32
    %26 = arith.muli %arg1, %c384_i32_13 : i32
    %c256_i32 = arith.constant 256 : i32
    %27 = arith.addi %26, %c256_i32 : i32
    %28 = tpu.assume_multiple %27, 128 : i32
    %c0_14 = arith.constant 0 : index
    %29 = arith.index_cast %28 : i32 to index
    %30 = vector.load %arg3[%c0_14, %29] : memref<1x768xf32, #tpu.memory_space<vmem>>, vector<1x128xf32>
    %c0_15 = arith.constant 0 : index
    %c0_16 = arith.constant 0 : index
    %c256 = arith.constant 256 : index
    %31 = vector.load %arg4[%c0_15, %c0_16, %c256] : memref<1x196x384xf32, #tpu.memory_space<vmem>>, vector<1x196x128xf32>
    %32 = vector.shape_cast %31 : vector<1x196x128xf32> to vector<196x128xf32>
    %33 = vector.broadcast %30 : vector<1x128xf32> to vector<196x128xf32>
    %34 = arith.mulf %32, %33 : vector<196x128xf32>
    %35 = tpu.transpose %34, [1, 0] : vector<196x128xf32> -> vector<128x196xf32>
    %c0_17 = arith.constant 0 : index
    %c256_18 = arith.constant 256 : index
    %c0_19 = arith.constant 0 : index
    %36 = vector.load %arg5[%c0_17, %c256_18, %c0_19] : memref<1x384x196xf32, #tpu.memory_space<vmem>>, vector<1x128x196xf32>
    %37 = vector.shape_cast %36 : vector<1x128x196xf32> to vector<128x196xf32>
    %38 = vector.shape_cast %35 : vector<128x196xf32> to vector<1x128x196xf32>
    tpu.vector_store %arg5[%c0_17, %c256_18, %c0_19], %38 {strides = array<i32>} : memref<1x384x196xf32, #tpu.memory_space<vmem>>, vector<1x128x196xf32>,
    return
  }
  func.func @transform_0(%arg0: i32, %arg1: i32, %arg2: i32) -> (i32, i32) {
    %c0_i32 = arith.constant 0 : i32
    %c0_i32_0 = arith.constant 0 : i32
    %c0_i32_1 = arith.constant 0 : i32
    return %c0_i32, %c0_i32_0 : i32, i32
  }
  func.func @transform_1(%arg0: i32, %arg1: i32, %arg2: i32) -> (i32, i32, i32) {
    %c0_i32 = arith.constant 0 : i32
    return %arg0, %arg2, %arg1 : i32, i32, i32
  }
  func.func @transform_2(%arg0: i32, %arg1: i32, %arg2: i32) -> (i32, i32, i32) {
    %c0_i32 = arith.constant 0 : i32
    return %arg0, %arg1, %arg2 : i32, i32, i32
  }
}

</mosaic_0001>

<llo_original>
// kernel: tpu_custom_call.1
$region0: #{tpu_custom_call.1}
  #allocation0 [shape = 'u32[]', space=smem, size = 0x4, offset = 0x4, fixed_abs, tag = 'smem constant byte address 0x4 - core index']
  #allocation1 [shape = 'u32[72,128]{1,0:T(1,128)}', space=vmem, size = 0x9000, scoped, tag = 'internal scratch']
  %s0 = inlined_call_operand.vmem [shape: f32[1,768], index: 0, kind: input, shape index: {}]
  %s1 = inlined_call_operand.vmem [shape: f32[1,196,768], index: 1, kind: input, shape index: {}]
  %s2 = inlined_call_operand.vmem [shape: f32[1,768,196], index: 2, kind: output, shape index: {}]
  %s3 = sld [smem:[#allocation0]]
  $region64: #{tpu_custom_call.1} parent=0
    _
  %s5 = ssub.s32 1, %s3
  %s6 = scalar_select 0, %s5, %s3
  $region1: #{tpu_custom_call.1} parent=0
    #allocation2 [shape = 'u8[614400]{0}', space=vmem, size = 0x96000, scoped, tag = 'input window, operand 1']
    loop: start=0, step=1, limit=4
    $region2: #{tpu_custom_call.1} parent=1 // loop_pre_header
      _
    $region3: #{tpu_custom_call.1} parent=1 // loop_header
      %s8 = sphi 0, %s12
      %p9 = scmp.ge.s32.totalorder %s8, 4
      %s15 = sphi 0, %s34
      %s16 = sphi 0, %s30
      %s17 = sphi 0, %s26
      %s18 = sphi 0, %s15
      %s19 = sphi 0, %s16
      %s20 = sphi 0, %s17
      %s21 = sphi 0, %s18
      %s22 = sphi 0, %s19
      %s23 = sphi 0, %s20
      %s35 = sphi 0, %s35
      %s37 = sphi 0, %s35
      %s38 = sphi 0, %s37
      %s52 = sphi 0, %s38
      %s62 = sphi 0, %s64
      %s65 = sphi 0, %s62
      %s66 = sphi 0, %s65
      %s82 = sphi 0, %s66
      %s92 = sphi 0, %s94
      %s95 = sphi 0, %s92
      %s96 = sphi 0, %s95
      %s112 = sphi 0, %s96
    $region4: #{tpu_custom_call.1} parent=1 // loop_header_branch
      %11 = sbr.rel (%p9) target = $region8
    $region5: #{tpu_custom_call.1} parent=1 // loop_body
      %s13 = ssub.s32 %s8, 1
      %s14 = ssub.s32 %s8, 2
      %s24 = sadd.s32 1, %s17
      %p25 = scmp.ge.s32.totalorder %s24, 1
      %s26 = scalar_select %p25, 0, %s24
      %s27 = sadd.s32 1, %s16
      %s28 = scalar_select %p25, %s27, %s16
      %p29 = scmp.ge.s32.totalorder %s28, 2
      %s30 = scalar_select %p29, 0, %s28
      %s31 = sadd.s32 1, %s15
      %s32 = scalar_select %p29, %s31, %s15
      %p33 = scmp.ge.s32.totalorder %s32, 1
      %s34 = scalar_select %p33, 0, %s32
      %s36 = sadd.s32 %s35, 1
      %p39 = scmp.eq.s32.totalorder %s8, 1
      %p40 = scmp.ne.s32.totalorder %s35, %s37
      %p41 = scmp.eq.s32.totalorder %s8, 0
      %p42 = por %p40, %p41
      %p43 = scmp.ne.s32.totalorder %s35, %s37
      %p44 = scmp.eq.s32.totalorder %s13, 1
      %p45 = por %p43, %p44
      %p46 = scmp.ne.s32.totalorder %s37, %s38
      %p47 = scmp.eq.s32.totalorder %s13, 0
      %p48 = por %p46, %p47
      %p49 = scmp.ne.s32.totalorder %s37, %s38
      %p50 = scmp.eq.s32.totalorder %s14, 1
      %p51 = por %p49, %p50
      %p53 = scmp.ne.s32.totalorder %s38, %s52
      %p54 = scmp.eq.s32.totalorder %s14, 0
      %p55 = por %p53, %p54
      %s56 = ssub.s32 %s15, %s34
      %s57 = ssub.s32 %s17, %s26
      %s58 = sor.u32 %s56, %s57
      %s59 = ssub.s32 %s16, %s30
      %s60 = sor.u32 %s58, %s59
      %p61 = scmp.eq.s32.totalorder %s60, 0
      %s63 = sadd.s32 %s62, 1
      %s64 = scalar_select %p61, %s62, %s63
      %p67 = pneg %p61
      %p68 = scmp.eq.s32.totalorder %s8, 1
      %p69 = por %p67, %p68
      %p70 = scmp.ne.s32.totalorder %s62, %s65
      %p71 = scmp.eq.s32.totalorder %s8, 0
      %p72 = por %p70, %p71
      %p73 = scmp.ne.s32.totalorder %s62, %s65
      %p74 = scmp.eq.s32.totalorder %s13, 1
      %p75 = por %p73, %p74
      %p76 = scmp.ne.s32.totalorder %s65, %s66
      %p77 = scmp.eq.s32.totalorder %s13, 0
      %p78 = por %p76, %p77
      %p79 = scmp.ne.s32.totalorder %s65, %s66
      %p80 = scmp.eq.s32.totalorder %s14, 1
      %p81 = por %p79, %p80
      %p83 = scmp.ne.s32.totalorder %s66, %s82
      %p84 = scmp.eq.s32.totalorder %s14, 0
      %p85 = por %p83, %p84
      %s86 = ssub.s32 %s15, %s34
      %s87 = ssub.s32 %s16, %s30
      %s88 = sor.u32 %s86, %s87
      %s89 = ssub.s32 %s17, %s26
      %s90 = sor.u32 %s88, %s89
      %p91 = scmp.eq.s32.totalorder %s90, 0
      %s93 = sadd.s32 %s92, 1
      %s94 = scalar_select %p91, %s92, %s93
      %p97 = pneg %p91
      %p98 = scmp.eq.s32.totalorder %s8, 1
      %p99 = por %p97, %p98
      %p100 = scmp.ne.s32.totalorder %s92, %s95
      %p101 = scmp.eq.s32.totalorder %s8, 0
      %p102 = por %p100, %p101
      %p103 = scmp.ne.s32.totalorder %s92, %s95
      %p104 = scmp.eq.s32.totalorder %s13, 1
      %p105 = por %p103, %p104
      %p106 = scmp.ne.s32.totalorder %s95, %s96
      %p107 = scmp.eq.s32.totalorder %s13, 0
      %p108 = por %p106, %p107
      %p109 = scmp.ne.s32.totalorder %s95, %s96
      %p110 = scmp.eq.s32.totalorder %s14, 1
      %p111 = por %p109, %p110
      %p113 = scmp.ne.s32.totalorder %s96, %s112
      %p114 = scmp.eq.s32.totalorder %s14, 0
      %p115 = por %p113, %p114
      %p116 = scmp.le.s32.totalorder 1, %s8
      %p117 = scmp.lt.s32.totalorder %s8, 3
      %p118 = pnand %p116, %p117
      %p119 = pneg %p118
      // Predicated region
      $region9: #{tpu_custom_call.1} parent=5 // pred_check
        _
      $region10: #{tpu_custom_call.1} parent=5 // pred_check_branch
        %121 = sbr.rel (%p118) target = $region12
      $region11: #{tpu_custom_call.1} parent=5 // pred_region
        %s122 = ssub.s32 %s8, 1
        // Predicated region
        $region13: #{tpu_custom_call.1} parent=11 // pred_check
          %p123 = pneg %p48
        $region14: #{tpu_custom_call.1} parent=11 // pred_check_branch
          %125 = sbr.rel (%p123) target = $region16
        $region15: #{tpu_custom_call.1} parent=11 // pred_region
          _
        $region16: #{tpu_custom_call.1} parent=11 // pred_fallthru
          _
      $region12: #{tpu_custom_call.1} parent=5 // pred_fallthru
        _
      %p126 = scmp.lt.s32.totalorder %s8, 2
      // Predicated region
      $region17: #{tpu_custom_call.1} parent=5 // pred_check
        %p127 = pneg %p126
      $region18: #{tpu_custom_call.1} parent=5 // pred_check_branch
        %129 = sbr.rel (%p127) target = $region20
      $region19: #{tpu_custom_call.1} parent=5 // pred_region
        // Predicated region
        $region21: #{tpu_custom_call.1} parent=19 // pred_check
          %p130 = pneg %p72
        $region22: #{tpu_custom_call.1} parent=19 // pred_check_branch
          %132 = sbr.rel (%p130) target = $region24
        $region23: #{tpu_custom_call.1} parent=19 // pred_region
          %s133 = sand.u32 %s62, 1
          %s134 = sand.u32 %s62, 1
          %s135 = smul.addr %s134, 600
          %s136 = scalar_lea.vmem [#allocation2], %s135
          %s137 = smul.u32 25, %s17
          %s138 = smul.u32 3, %s16
          %s139 = smul.addr %s137, 6
          %s140 = sadd.s32 %s138, %s139
          %s141 = smul.addr %s15, 150
          %s142 = sadd.s32 %s140, %s141
          %s143 = smul.addr %s142, 8
          %s144 = scalar_lea.vmem %s1, %s143
          // Predicated region
          $region25: #{tpu_custom_call.1} parent=23 // pred_check
            _
          $region26: #{tpu_custom_call.1} parent=23 // pred_check_branch
            %146 = sbr.rel (0) target = $region28
          $region27: #{tpu_custom_call.1} parent=23 // pred_region
            // Predicated region
            $region29: #{tpu_custom_call.1} parent=27 // pred_check
              _
            $region30: #{tpu_custom_call.1} parent=27 // pred_check_branch
              %148 = sbr.rel (0) target = $region32
            $region31: #{tpu_custom_call.1} parent=27 // pred_region
              loop: start=0, step=1, limit=1
              $region33: #{tpu_custom_call.1} parent=31 // loop_pre_header
                _
              $region34: #{tpu_custom_call.1} parent=31 // loop_header
                %s150 = sphi 0, %s154
                %p151 = scmp.ge.s32.totalorder %s150, 1
                %s155 = sphi %s144, %s144
                %s156 = sphi %s136, %s136
              $region35: #{tpu_custom_call.1} parent=31 // loop_header_branch
                %153 = sbr.rel (%p151) target = $region39
              $region36: #{tpu_custom_call.1} parent=31 // loop_body
                %v157 = vld [vmem:[%s155] sm:$0xff]
                %158 = vst [vmem:[%s156] sm:$0xff] %v157
                %v159 = vld [vmem:[%s155 + $0x8] sm:$0xff]
                %160 = vst [vmem:[%s156 + $0x8] sm:$0xff] %v159
                %v161 = vld [vmem:[%s155 + $0x10] sm:$0xff]
                %162 = vst [vmem:[%s156 + $0x10] sm:$0xff] %v161
                %v163 = vld [vmem:[%s155 + $0x30] sm:$0xff]
                %164 = vst [vmem:[%s156 + $0x18] sm:$0xff] %v163
                %v165 = vld [vmem:[%s155 + $0x38] sm:$0xff]
                %166 = vst [vmem:[%s156 + $0x20] sm:$0xff] %v165
                %v167 = vld [vmem:[%s155 + $0x40] sm:$0xff]
                %168 = vst [vmem:[%s156 + $0x28] sm:$0xff] %v167
                %v169 = vld [vmem:[%s155 + $0x60] sm:$0xff]
                %170 = vst [vmem:[%s156 + $0x30] sm:$0xff] %v169
                %v171 = vld [vmem:[%s155 + $0x68] sm:$0xff]
                %172 = vst [vmem:[%s156 + $0x38] sm:$0xff] %v171
                %v173 = vld [vmem:[%s155 + $0x70] sm:$0xff]
                %174 = vst [vmem:[%s156 + $0x40] sm:$0xff] %v173
                %v175 = vld [vmem:[%s155 + $0x90] sm:$0xff]
                %176 = vst [vmem:[%s156 + $0x48] sm:$0xff] %v175
                %v177 = vld [vmem:[%s155 + $0x98] sm:$0xff]
                %178 = vst [vmem:[%s156 + $0x50] sm:$0xff] %v177
                %v179 = vld [vmem:[%s155 + $0xa0] sm:$0xff]
                %180 = vst [vmem:[%s156 + $0x58] sm:$0xff] %v179
                %v181 = vld [vmem:[%s155 + $0xc0] sm:$0xff]
                %182 = vst [vmem:[%s156 + $0x60] sm:$0xff] %v181
                %v183 = vld [vmem:[%s155 + $0xc8] sm:$0xff]
                %184 = vst [vmem:[%s156 + $0x68] sm:$0xff] %v183
                %v185 = vld [vmem:[%s155 + $0xd0] sm:$0xff]
                %186 = vst [vmem:[%s156 + $0x70] sm:$0xff] %v185
                %v187 = vld [vmem:[%s155 + $0xf0] sm:$0xff]
                %188 = vst [vmem:[%s156 + $0x78] sm:$0xff] %v187
                %v189 = vld [vmem:[%s155 + $0xf8] sm:$0xff]
                %190 = vst [vmem:[%s156 + $0x80] sm:$0xff] %v189
                %v191 = vld [vmem:[%s155 + $0x100] sm:$0xff]
                %192 = vst [vmem:[%s156 + $0x88] sm:$0xff] %v191
                %v193 = vld [vmem:[%s155 + $0x120] sm:$0xff]
                %194 = vst [vmem:[%s156 + $0x90] sm:$0xff] %v193
                %v195 = vld [vmem:[%s155 + $0x128] sm:$0xff]
                %196 = vst [vmem:[%s156 + $0x98] sm:$0xff] %v195
                %v197 = vld [vmem:[%s155 + $0x130] sm:$0xff]
                %198 = vst [vmem:[%s156 + $0xa0] sm:$0xff] %v197
                %v199 = vld [vmem:[%s155 + $0x150] sm:$0xff]
                %200 = vst [vmem:[%s156 + $0xa8] sm:$0xff] %v199
                %v201 = vld [vmem:[%s155 + $0x158] sm:$0xff]
                %202 = vst [vmem:[%s156 + $0xb0] sm:$0xff] %v201
                %v203 = vld [vmem:[%s155 + $0x160] sm:$0xff]
                %204 = vst [vmem:[%s156 + $0xb8] sm:$0xff] %v203
                %v205 = vld [vmem:[%s155 + $0x180] sm:$0xff]
                %206 = vst [vmem:[%s156 + $0xc0] sm:$0xff] %v205
                %v207 = vld [vmem:[%s155 + $0x188] sm:$0xff]
                %208 = vst [vmem:[%s156 + $0xc8] sm:$0xff] %v207
                %v209 = vld [vmem:[%s155 + $0x190] sm:$0xff]
                %210 = vst [vmem:[%s156 + $0xd0] sm:$0xff] %v209
                %v211 = vld [vmem:[%s155 + $0x1b0] sm:$0xff]
                %212 = vst [vmem:[%s156 + $0xd8] sm:$0xff] %v211
                %v213 = vld [vmem:[%s155 + $0x1b8] sm:$0xff]
                %214 = vst [vmem:[%s156 + $0xe0] sm:$0xff] %v213
                %v215 = vld [vmem:[%s155 + $0x1c0] sm:$0xff]
                %216 = vst [vmem:[%s156 + $0xe8] sm:$0xff] %v215
                %v217 = vld [vmem:[%s155 + $0x1e0] sm:$0xff]
                %218 = vst [vmem:[%s156 + $0xf0] sm:$0xff] %v217
                %v219 = vld [vmem:[%s155 + $0x1e8] sm:$0xff]
                %220 = vst [vmem:[%s156 + $0xf8] sm:$0xff] %v219
                %v221 = vld [vmem:[%s155 + $0x1f0] sm:$0xff]
                %222 = vst [vmem:[%s156 + $0x100] sm:$0xff] %v221
                %v223 = vld [vmem:[%s155 + $0x210] sm:$0xff]
                %224 = vst [vmem:[%s156 + $0x108] sm:$0xff] %v223
                %v225 = vld [vmem:[%s155 + $0x218] sm:$0xff]
                %226 = vst [vmem:[%s156 + $0x110] sm:$0xff] %v225
                %v227 = vld [vmem:[%s155 + $0x220] sm:$0xff]
                %228 = vst [vmem:[%s156 + $0x118] sm:$0xff] %v227
                %v229 = vld [vmem:[%s155 + $0x240] sm:$0xff]
                %230 = vst [vmem:[%s156 + $0x120] sm:$0xff] %v229
                %v231 = vld [vmem:[%s155 + $0x248] sm:$0xff]
                %232 = vst [vmem:[%s156 + $0x128] sm:$0xff] %v231
                %v233 = vld [vmem:[%s155 + $0x250] sm:$0xff]
                %234 = vst [vmem:[%s156 + $0x130] sm:$0xff] %v233
                %v235 = vld [vmem:[%s155 + $0x270] sm:$0xff]
                %236 = vst [vmem:[%s156 + $0x138] sm:$0xff] %v235
                %v237 = vld [vmem:[%s155 + $0x278] sm:$0xff]
                %238 = vst [vmem:[%s156 + $0x140] sm:$0xff] %v237
                %v239 = vld [vmem:[%s155 + $0x280] sm:$0xff]
                %240 = vst [vmem:[%s156 + $0x148] sm:$0xff] %v239
                %v241 = vld [vmem:[%s155 + $0x2a0] sm:$0xff]
                %242 = vst [vmem:[%s156 + $0x150] sm:$0xff] %v241
                %v243 = vld [vmem:[%s155 + $0x2a8] sm:$0xff]
                %244 = vst [vmem:[%s156 + $0x158] sm:$0xff] %v243
                %v245 = vld [vmem:[%s155 + $0x2b0] sm:$0xff]
                %246 = vst [vmem:[%s156 + $0x160] sm:$0xff] %v245
                %v247 = vld [vmem:[%s155 + $0x2d0] sm:$0xff]
                %248 = vst [vmem:[%s156 + $0x168] sm:$0xff] %v247
                %v249 = vld [vmem:[%s155 + $0x2d8] sm:$0xff]
                %250 = vst [vmem:[%s156 + $0x170] sm:$0xff] %v249
                %v251 = vld [vmem:[%s155 + $0x2e0] sm:$0xff]
                %252 = vst [vmem:[%s156 + $0x178] sm:$0xff] %v251
                %v253 = vld [vmem:[%s155 + $0x300] sm:$0xff]
                %254 = vst [vmem:[%s156 + $0x180] sm:$0xff] %v253
                %v255 = vld [vmem:[%s155 + $0x308] sm:$0xff]
                %256 = vst [vmem:[%s156 + $0x188] sm:$0xff] %v255
                %v257 = vld [vmem:[%s155 + $0x310] sm:$0xff]
                %258 = vst [vmem:[%s156 + $0x190] sm:$0xff] %v257
                %v259 = vld [vmem:[%s155 + $0x330] sm:$0xff]
                %260 = vst [vmem:[%s156 + $0x198] sm:$0xff] %v259
                %v261 = vld [vmem:[%s155 + $0x338] sm:$0xff]
                %262 = vst [vmem:[%s156 + $0x1a0] sm:$0xff] %v261
                %v263 = vld [vmem:[%s155 + $0x340] sm:$0xff]
                %264 = vst [vmem:[%s156 + $0x1a8] sm:$0xff] %v263
                %v265 = vld [vmem:[%s155 + $0x360] sm:$0xff]
                %266 = vst [vmem:[%s156 + $0x1b0] sm:$0xff] %v265
                %v267 = vld [vmem:[%s155 + $0x368] sm:$0xff]
                %268 = vst [vmem:[%s156 + $0x1b8] sm:$0xff] %v267
                %v269 = vld [vmem:[%s155 + $0x370] sm:$0xff]
                %270 = vst [vmem:[%s156 + $0x1c0] sm:$0xff] %v269
                %v271 = vld [vmem:[%s155 + $0x390] sm:$0xff]
                %272 = vst [vmem:[%s156 + $0x1c8] sm:$0xff] %v271
                %v273 = vld [vmem:[%s155 + $0x398] sm:$0xff]
                %274 = vst [vmem:[%s156 + $0x1d0] sm:$0xff] %v273
                %v275 = vld [vmem:[%s155 + $0x3a0] sm:$0xff]
                %276 = vst [vmem:[%s156 + $0x1d8] sm:$0xff] %v275
                %v277 = vld [vmem:[%s155 + $0x3c0] sm:$0xff]
                %278 = vst [vmem:[%s156 + $0x1e0] sm:$0xff] %v277
                %v279 = vld [vmem:[%s155 + $0x3c8] sm:$0xff]
                %280 = vst [vmem:[%s156 + $0x1e8] sm:$0xff] %v279
                %v281 = vld [vmem:[%s155 + $0x3d0] sm:$0xff]
                %282 = vst [vmem:[%s156 + $0x1f0] sm:$0xff] %v281
                %v283 = vld [vmem:[%s155 + $0x3f0] sm:$0xff]
                %284 = vst [vmem:[%s156 + $0x1f8] sm:$0xff] %v283
                %v285 = vld [vmem:[%s155 + $0x3f8] sm:$0xff]
                %286 = vst [vmem:[%s156 + $0x200] sm:$0xff] %v285
                %v287 = vld [vmem:[%s155 + $0x400] sm:$0xff]
                %288 = vst [vmem:[%s156 + $0x208] sm:$0xff] %v287
                %v289 = vld [vmem:[%s155 + $0x420] sm:$0xff]
                %290 = vst [vmem:[%s156 + $0x210] sm:$0xff] %v289
                %v291 = vld [vmem:[%s155 + $0x428] sm:$0xff]
                %292 = vst [vmem:[%s156 + $0x218] sm:$0xff] %v291
                %v293 = vld [vmem:[%s155 + $0x430] sm:$0xff]
                %294 = vst [vmem:[%s156 + $0x220] sm:$0xff] %v293
                %v295 = vld [vmem:[%s155 + $0x450] sm:$0xff]
                %296 = vst [vmem:[%s156 + $0x228] sm:$0xff] %v295
                %v297 = vld [vmem:[%s155 + $0x458] sm:$0xff]
                %298 = vst [vmem:[%s156 + $0x230] sm:$0xff] %v297
                %v299 = vld [vmem:[%s155 + $0x460] sm:$0xff]
                %300 = vst [vmem:[%s156 + $0x238] sm:$0xff] %v299
                %v301 = vld [vmem:[%s155 + $0x480] sm:$0xff]
                %302 = vst [vmem:[%s156 + $0x240] sm:$0xff] %v301
                %v303 = vld [vmem:[%s155 + $0x488] sm:$0xff]
                %304 = vst [vmem:[%s156 + $0x248] sm:$0xff] %v303
                %v305 = vld [vmem:[%s155 + $0x490] sm:$0xff]
                %306 = vst [vmem:[%s156 + $0x250] sm:$0xff] %v305
              $region37: #{tpu_custom_call.1} parent=31 // loop_footer
                %s154 = sadd.s32 1, %s150
              $region38: #{tpu_custom_call.1} parent=31 // loop_footer_branch
                %149 = sbr.rel target = $region34
              $region39: #{tpu_custom_call.1} parent=31 // loop_exit
                _
            $region32: #{tpu_custom_call.1} parent=27 // pred_fallthru
              _
            // Predicated region
            $region40: #{tpu_custom_call.1} parent=27 // pred_check
              _
            $region41: #{tpu_custom_call.1} parent=27 // pred_check_branch
              %308 = sbr.rel target = $region43
            $region42: #{tpu_custom_call.1} parent=27 // pred_region
              _
            $region43: #{tpu_custom_call.1} parent=27 // pred_fallthru
              _
          $region28: #{tpu_custom_call.1} parent=23 // pred_fallthru
            _
          %309 = vnop
        $region24: #{tpu_custom_call.1} parent=19 // pred_fallthru
          _
      $region20: #{tpu_custom_call.1} parent=5 // pred_fallthru
        _
      %p310 = scmp.le.s32.totalorder 1, %s8
      %p311 = scmp.lt.s32.totalorder %s8, 3
      %p312 = pnand %p310, %p311
      %p313 = pneg %p312
      // Predicated region
      $region44: #{tpu_custom_call.1} parent=5 // pred_check
        _
      $region45: #{tpu_custom_call.1} parent=5 // pred_check_branch
        %315 = sbr.rel (%p312) target = $region47
      $region46: #{tpu_custom_call.1} parent=5 // pred_region
        %s316 = ssub.s32 %s8, 1
        %s317 = sand.u32 %s65, 1
        %s318 = sand.u32 %s65, 1
        %s319 = smul.addr %s318, 600
        %s320 = scalar_lea.vmem [#allocation2], %s319
        // Predicated region
        $region48: #{tpu_custom_call.1} parent=46 // pred_check
          %p321 = pneg %p78
        $region49: #{tpu_custom_call.1} parent=46 // pred_check_branch
          %323 = sbr.rel (%p321) target = $region51
        $region50: #{tpu_custom_call.1} parent=46 // pred_region
          _
        $region51: #{tpu_custom_call.1} parent=46 // pred_fallthru
          _
        %p324 = pneg %p48
        %p325 = pneg %p45
        %s326 = sand.u32 %s65, 1
        %s327 = sand.u32 %s65, 1
        %s328 = smul.addr %s327, 600
        %s329 = scalar_lea.vmem [#allocation2], %s328
        %p330 = pneg %p78
        %p331 = pneg %p75
        %p332 = pneg %p108
        %p333 = pneg %p105
        %s334 = smul.u32 48, %s19
        %s335 = smul.u32 2, %s20
        %p336 = scmp.lt.s32.totalorder %s18, 0
        %s337 = scalar_select %p336, %s18, 0
        %p338 = scmp.lt.s32.totalorder %s334, 95
        %s339 = scalar_select %p338, %s334, 95
        %p340 = scmp.lt.s32.totalorder %s335, 1
        %s341 = scalar_select %p340, %s335, 1
        %s342 = smul.addr %s339, 2
        %s343 = sadd.s32 %s341, %s342
        %s344 = smul.addr %s337, 192
        %s345 = sadd.s32 %s343, %s344
        %s346 = smul.addr %s345, 8
        %s347 = scalar_lea.vmem %s2, %s346
        %s348 = smul.u32 25, %s20
        %s349 = smul.u32 3, %s19
        %s350 = smul.u32 48, %s19
        %s351 = smul.u32 2, %s20
        %p352 = scmp.lt.s32.totalorder %s18, 0
        %s353 = scalar_select %p352, %s18, 0
        %p354 = scmp.lt.s32.totalorder %s350, 95
        %s355 = scalar_select %p354, %s350, 95
        %p356 = scmp.lt.s32.totalorder %s351, 1
        %s357 = scalar_select %p356, %s351, 1
        %s358 = smul.addr %s355, 2
        %s359 = sadd.s32 %s357, %s358
        %s360 = smul.addr %s353, 192
        %s361 = sadd.s32 %s359, %s360
        %s362 = smul.addr %s361, 8
        %s363 = scalar_lea.vmem %s2, %s362
        %s364 = smul.u32 48, %s19
        %s365 = smul.u32 2, %s20
        %s366 = smul.u32 %s19, 384
        %s367 = sshra.s32 %s366, 7
        %s368 = sand.u32 %s366, 127
        %s369 = scalar_lea.vmem %s0, %s367
        %v370 = vld [vmem:[%s369] sm:$0x1]
        %v371 = vld [vmem:[%s320] sm:$0xff]
        %v372 = vld [vmem:[%s320 + $0x18] sm:$0xff]
        %v373 = vld [vmem:[%s320 + $0x30] sm:$0xff]
        %v374 = vld [vmem:[%s320 + $0x48] sm:$0xff]
        %v375 = vld [vmem:[%s320 + $0x60] sm:$0xff]
        %v376 = vld [vmem:[%s320 + $0x78] sm:$0xff]
        %v377 = vld [vmem:[%s320 + $0x90] sm:$0xff]
        %v378 = vld [vmem:[%s320 + $0xa8] sm:$0xff]
        %v379 = vld [vmem:[%s320 + $0xc0] sm:$0xff]
        %v380 = vld [vmem:[%s320 + $0xd8] sm:$0xff]
        %v381 = vld [vmem:[%s320 + $0xf0] sm:$0xff]
        %v382 = vld [vmem:[%s320 + $0x108] sm:$0xff]
        %v383 = vld [vmem:[%s320 + $0x120] sm:$0xff]
        %v384 = vld [vmem:[%s320 + $0x138] sm:$0xff]
        %v385 = vld [vmem:[%s320 + $0x150] sm:$0xff]
        %v386 = vld [vmem:[%s320 + $0x168] sm:$0xff]
        %v387 = vld [vmem:[%s320 + $0x180] sm:$0xff]
        %v388 = vld [vmem:[%s320 + $0x198] sm:$0xff]
        %v389 = vld [vmem:[%s320 + $0x1b0] sm:$0xff]
        %v390 = vld [vmem:[%s320 + $0x1c8] sm:$0xff]
        %v391 = vld [vmem:[%s320 + $0x1e0] sm:$0xff]
        %v392 = vld [vmem:[%s320 + $0x1f8] sm:$0xff]
        %v393 = vld [vmem:[%s320 + $0x210] sm:$0xff]
        %v394 = vld [vmem:[%s320 + $0x228] sm:$0xff]
        %v395 = vld [vmem:[%s320 + $0x240] sm:$0xf]
        %v397 = vperm.slane %v370, 0
        %v399 = vmul.f32 %v371, %v397
        %v400 = vmul.f32 %v372, %v397
        %v401 = vmul.f32 %v373, %v397
        %v402 = vmul.f32 %v374, %v397
        %v403 = vmul.f32 %v375, %v397
        %v404 = vmul.f32 %v376, %v397
        %v405 = vmul.f32 %v377, %v397
        %v406 = vmul.f32 %v378, %v397
        %v407 = vmul.f32 %v379, %v397
        %v408 = vmul.f32 %v380, %v397
        %v409 = vmul.f32 %v381, %v397
        %v410 = vmul.f32 %v382, %v397
        %v411 = vmul.f32 %v383, %v397
        %v412 = vmul.f32 %v384, %v397
        %v413 = vmul.f32 %v385, %v397
        %v414 = vmul.f32 %v386, %v397
        %v415 = vmul.f32 %v387, %v397
        %v416 = vmul.f32 %v388, %v397
        %v417 = vmul.f32 %v389, %v397
        %v418 = vmul.f32 %v390, %v397
        %v419 = vmul.f32 %v391, %v397
        %v420 = vmul.f32 %v392, %v397
        %v421 = vmul.f32 %v393, %v397
        %v422 = vmul.f32 %v394, %v397
        %v423 = vmul.f32 %v395, %v397
        %424 = vxpose.xlu0.b32.start [1/16] %v399, 128
        %425 = vxpose.xlu0.b32.cont [2/16] %v400, 128
        %426 = vxpose.xlu0.b32.cont [3/16] %v401, 128
        %427 = vxpose.xlu0.b32.cont [4/16] %v402, 128
        %428 = vxpose.xlu0.b32.cont [5/16] %v403, 128
        %429 = vxpose.xlu0.b32.cont [6/16] %v404, 128
        %430 = vxpose.xlu0.b32.cont [7/16] %v405, 128
        %431 = vxpose.xlu0.b32.cont [8/16] %v406, 128
        %432 = vxpose.xlu0.b32.cont [9/16] %v407, 128
        %433 = vxpose.xlu0.b32.cont [10/16] %v408, 128
        %434 = vxpose.xlu0.b32.cont [11/16] %v409, 128
        %435 = vxpose.xlu0.b32.cont [12/16] %v410, 128
        %436 = vxpose.xlu0.b32.cont [13/16] %v411, 128
        %437 = vxpose.xlu0.b32.cont [14/16] %v412, 128
        %438 = vxpose.xlu0.b32.cont [15/16] %v413, 128
        %439 = vxpose.xlu0.b32.end [16/16] %v414, 128
        %v440 = vpop.trf.xlu0
        %v441 = vpop.trf.xlu0
        %v442 = vpop.trf.xlu0
        %v443 = vpop.trf.xlu0
        %v444 = vpop.trf.xlu0
        %v445 = vpop.trf.xlu0
        %v446 = vpop.trf.xlu0
        %v447 = vpop.trf.xlu0
        %v448 = vpop.trf.xlu0
        %v449 = vpop.trf.xlu0
        %v450 = vpop.trf.xlu0
        %v451 = vpop.trf.xlu0
        %v452 = vpop.trf.xlu0
        %v453 = vpop.trf.xlu0
        %v454 = vpop.trf.xlu0
        %v455 = vpop.trf.xlu0
        %456 = vxpose.xlu0.b32.start [1/16] %v415, 128
        %457 = vxpose.xlu0.b32.cont [2/16] %v416, 128
        %458 = vxpose.xlu0.b32.cont [3/16] %v417, 128
        %459 = vxpose.xlu0.b32.cont [4/16] %v418, 128
        %460 = vxpose.xlu0.b32.cont [5/16] %v419, 128
        %461 = vxpose.xlu0.b32.cont [6/16] %v420, 128
        %462 = vxpose.xlu0.b32.cont [7/16] %v421, 128
        %463 = vxpose.xlu0.b32.cont [8/16] %v422, 128
        %464 = vxpose.xlu0.b32.cont [9/16] %v423, 128
        %465 = vxpose.xlu0.b32.cont [10/16] 0.0, 128
        %466 = vxpose.xlu0.b32.cont [11/16] 0.0, 128
        %467 = vxpose.xlu0.b32.cont [12/16] 0.0, 128
        %468 = vxpose.xlu0.b32.cont [13/16] 0.0, 128
        %469 = vxpose.xlu0.b32.cont [14/16] 0.0, 128
        %470 = vxpose.xlu0.b32.cont [15/16] 0.0, 128
        %471 = vxpose.xlu0.b32.end [16/16] 0.0, 128
        %v472 = vpop.trf.xlu0
        %v473 = vpop.trf.xlu0
        %v474 = vpop.trf.xlu0
        %v475 = vpop.trf.xlu0
        %v476 = vpop.trf.xlu0
        %v477 = vpop.trf.xlu0
        %v478 = vpop.trf.xlu0
        %v479 = vpop.trf.xlu0
        %v480 = vpop.trf.xlu0
        %v481 = vpop.trf.xlu0
        %v482 = vpop.trf.xlu0
        %v483 = vpop.trf.xlu0
        %v484 = vpop.trf.xlu0
        %v485 = vpop.trf.xlu0
        %v486 = vpop.trf.xlu0
        %v487 = vpop.trf.xlu0
        %488 = vst [vmem:[%s363] sm:$0xff] %v440
        %vm489 = vcmask 556032
        %490 = vst.msk [vmem:[%s363 + $0x8] sm:$0xff] %vm489, %v472
        %491 = vst [vmem:[%s363 + $0x10] sm:$0xff] %v441
        %492 = vst.msk [vmem:[%s363 + $0x18] sm:$0xff] %vm489, %v473
        %493 = vst [vmem:[%s363 + $0x20] sm:$0xff] %v442
        %494 = vst.msk [vmem:[%s363 + $0x28] sm:$0xff] %vm489, %v474
        %495 = vst [vmem:[%s363 + $0x30] sm:$0xff] %v443
        %496 = vst.msk [vmem:[%s363 + $0x38] sm:$0xff] %vm489, %v475
        %497 = vst [vmem:[%s363 + $0x40] sm:$0xff] %v444
        %498 = vst.msk [vmem:[%s363 + $0x48] sm:$0xff] %vm489, %v476
        %499 = vst [vmem:[%s363 + $0x50] sm:$0xff] %v445
        %500 = vst.msk [vmem:[%s363 + $0x58] sm:$0xff] %vm489, %v477
        %501 = vst [vmem:[%s363 + $0x60] sm:$0xff] %v446
        %502 = vst.msk [vmem:[%s363 + $0x68] sm:$0xff] %vm489, %v478
        %503 = vst [vmem:[%s363 + $0x70] sm:$0xff] %v447
        %504 = vst.msk [vmem:[%s363 + $0x78] sm:$0xff] %vm489, %v479
        %505 = vst [vmem:[%s363 + $0x80] sm:$0xff] %v448
        %506 = vst.msk [vmem:[%s363 + $0x88] sm:$0xff] %vm489, %v480
        %507 = vst [vmem:[%s363 + $0x90] sm:$0xff] %v449
        %508 = vst.msk [vmem:[%s363 + $0x98] sm:$0xff] %vm489, %v481
        %509 = vst [vmem:[%s363 + $0xa0] sm:$0xff] %v450
        %510 = vst.msk [vmem:[%s363 + $0xa8] sm:$0xff] %vm489, %v482
        %511 = vst [vmem:[%s363 + $0xb0] sm:$0xff] %v451
        %512 = vst.msk [vmem:[%s363 + $0xb8] sm:$0xff] %vm489, %v483
        %513 = vst [vmem:[%s363 + $0xc0] sm:$0xff] %v452
        %514 = vst.msk [vmem:[%s363 + $0xc8] sm:$0xff] %vm489, %v484
        %515 = vst [vmem:[%s363 + $0xd0] sm:$0xff] %v453
        %516 = vst.msk [vmem:[%s363 + $0xd8] sm:$0xff] %vm489, %v485
        %517 = vst [vmem:[%s363 + $0xe0] sm:$0xff] %v454
        %518 = vst.msk [vmem:[%s363 + $0xe8] sm:$0xff] %vm489, %v486
        %519 = vst [vmem:[%s363 + $0xf0] sm:$0xff] %v455
        %520 = vst.msk [vmem:[%s363 + $0xf8] sm:$0xff] %vm489, %v487
        %s521 = sadd.s32 %s366, 128
        %s522 = sshra.s32 %s521, 7
        %s523 = sand.u32 %s521, 127
        %s524 = scalar_lea.vmem %s0, %s522
        %v525 = vld [vmem:[%s524] sm:$0x1]
        %v526 = vld [vmem:[%s320 + $0x8] sm:$0xff]
        %v527 = vld [vmem:[%s320 + $0x20] sm:$0xff]
        %v528 = vld [vmem:[%s320 + $0x38] sm:$0xff]
        %v529 = vld [vmem:[%s320 + $0x50] sm:$0xff]
        %v530 = vld [vmem:[%s320 + $0x68] sm:$0xff]
        %v531 = vld [vmem:[%s320 + $0x80] sm:$0xff]
        %v532 = vld [vmem:[%s320 + $0x98] sm:$0xff]
        %v533 = vld [vmem:[%s320 + $0xb0] sm:$0xff]
        %v534 = vld [vmem:[%s320 + $0xc8] sm:$0xff]
        %v535 = vld [vmem:[%s320 + $0xe0] sm:$0xff]
        %v536 = vld [vmem:[%s320 + $0xf8] sm:$0xff]
        %v537 = vld [vmem:[%s320 + $0x110] sm:$0xff]
        %v538 = vld [vmem:[%s320 + $0x128] sm:$0xff]
        %v539 = vld [vmem:[%s320 + $0x140] sm:$0xff]
        %v540 = vld [vmem:[%s320 + $0x158] sm:$0xff]
        %v541 = vld [vmem:[%s320 + $0x170] sm:$0xff]
        %v542 = vld [vmem:[%s320 + $0x188] sm:$0xff]
        %v543 = vld [vmem:[%s320 + $0x1a0] sm:$0xff]
        %v544 = vld [vmem:[%s320 + $0x1b8] sm:$0xff]
        %v545 = vld [vmem:[%s320 + $0x1d0] sm:$0xff]
        %v546 = vld [vmem:[%s320 + $0x1e8] sm:$0xff]
        %v547 = vld [vmem:[%s320 + $0x200] sm:$0xff]
        %v548 = vld [vmem:[%s320 + $0x218] sm:$0xff]
        %v549 = vld [vmem:[%s320 + $0x230] sm:$0xff]
        %v550 = vld [vmem:[%s320 + $0x248] sm:$0xf]
        %v552 = vperm.slane %v525, 0
        %v554 = vmul.f32 %v526, %v552
        %v555 = vmul.f32 %v527, %v552
        %v556 = vmul.f32 %v528, %v552
        %v557 = vmul.f32 %v529, %v552
        %v558 = vmul.f32 %v530, %v552
        %v559 = vmul.f32 %v531, %v552
        %v560 = vmul.f32 %v532, %v552
        %v561 = vmul.f32 %v533, %v552
        %v562 = vmul.f32 %v534, %v552
        %v563 = vmul.f32 %v535, %v552
        %v564 = vmul.f32 %v536, %v552
        %v565 = vmul.f32 %v537, %v552
        %v566 = vmul.f32 %v538, %v552
        %v567 = vmul.f32 %v539, %v552
        %v568 = vmul.f32 %v540, %v552
        %v569 = vmul.f32 %v541, %v552
        %v570 = vmul.f32 %v542, %v552
        %v571 = vmul.f32 %v543, %v552
        %v572 = vmul.f32 %v544, %v552
        %v573 = vmul.f32 %v545, %v552
        %v574 = vmul.f32 %v546, %v552
        %v575 = vmul.f32 %v547, %v552
        %v576 = vmul.f32 %v548, %v552
        %v577 = vmul.f32 %v549, %v552
        %v578 = vmul.f32 %v550, %v552
        %579 = vxpose.xlu0.b32.start [1/16] %v554, 128
        %580 = vxpose.xlu0.b32.cont [2/16] %v555, 128
        %581 = vxpose.xlu0.b32.cont [3/16] %v556, 128
        %582 = vxpose.xlu0.b32.cont [4/16] %v557, 128
        %583 = vxpose.xlu0.b32.cont [5/16] %v558, 128
        %584 = vxpose.xlu0.b32.cont [6/16] %v559, 128
        %585 = vxpose.xlu0.b32.cont [7/16] %v560, 128
        %586 = vxpose.xlu0.b32.cont [8/16] %v561, 128
        %587 = vxpose.xlu0.b32.cont [9/16] %v562, 128
        %588 = vxpose.xlu0.b32.cont [10/16] %v563, 128
        %589 = vxpose.xlu0.b32.cont [11/16] %v564, 128
        %590 = vxpose.xlu0.b32.cont [12/16] %v565, 128
        %591 = vxpose.xlu0.b32.cont [13/16] %v566, 128
        %592 = vxpose.xlu0.b32.cont [14/16] %v567, 128
        %593 = vxpose.xlu0.b32.cont [15/16] %v568, 128
        %594 = vxpose.xlu0.b32.end [16/16] %v569, 128
        %v595 = vpop.trf.xlu0
        %v596 = vpop.trf.xlu0
        %v597 = vpop.trf.xlu0
        %v598 = vpop.trf.xlu0
        %v599 = vpop.trf.xlu0
        %v600 = vpop.trf.xlu0
        %v601 = vpop.trf.xlu0
        %v602 = vpop.trf.xlu0
        %v603 = vpop.trf.xlu0
        %v604 = vpop.trf.xlu0
        %v605 = vpop.trf.xlu0
        %v606 = vpop.trf.xlu0
        %v607 = vpop.trf.xlu0
        %v608 = vpop.trf.xlu0
        %v609 = vpop.trf.xlu0
        %v610 = vpop.trf.xlu0
        %611 = vxpose.xlu0.b32.start [1/16] %v570, 128
        %612 = vxpose.xlu0.b32.cont [2/16] %v571, 128
        %613 = vxpose.xlu0.b32.cont [3/16] %v572, 128
        %614 = vxpose.xlu0.b32.cont [4/16] %v573, 128
        %615 = vxpose.xlu0.b32.cont [5/16] %v574, 128
        %616 = vxpose.xlu0.b32.cont [6/16] %v575, 128
        %617 = vxpose.xlu0.b32.cont [7/16] %v576, 128
        %618 = vxpose.xlu0.b32.cont [8/16] %v577, 128
        %619 = vxpose.xlu0.b32.cont [9/16] %v578, 128
        %620 = vxpose.xlu0.b32.cont [10/16] 0.0, 128
        %621 = vxpose.xlu0.b32.cont [11/16] 0.0, 128
        %622 = vxpose.xlu0.b32.cont [12/16] 0.0, 128
        %623 = vxpose.xlu0.b32.cont [13/16] 0.0, 128
        %624 = vxpose.xlu0.b32.cont [14/16] 0.0, 128
        %625 = vxpose.xlu0.b32.cont [15/16] 0.0, 128
        %626 = vxpose.xlu0.b32.end [16/16] 0.0, 128
        %v627 = vpop.trf.xlu0
        %v628 = vpop.trf.xlu0
        %v629 = vpop.trf.xlu0
        %v630 = vpop.trf.xlu0
        %v631 = vpop.trf.xlu0
        %v632 = vpop.trf.xlu0
        %v633 = vpop.trf.xlu0
        %v634 = vpop.trf.xlu0
        %v635 = vpop.trf.xlu0
        %v636 = vpop.trf.xlu0
        %v637 = vpop.trf.xlu0
        %v638 = vpop.trf.xlu0
        %v639 = vpop.trf.xlu0
        %v640 = vpop.trf.xlu0
        %v641 = vpop.trf.xlu0
        %v642 = vpop.trf.xlu0
        %643 = vst [vmem:[%s363 + $0x100] sm:$0xff] %v595
        %644 = vst.msk [vmem:[%s363 + $0x108] sm:$0xff] %vm489, %v627
        %645 = vst [vmem:[%s363 + $0x110] sm:$0xff] %v596
        %646 = vst.msk [vmem:[%s363 + $0x118] sm:$0xff] %vm489, %v628
        %647 = vst [vmem:[%s363 + $0x120] sm:$0xff] %v597
        %648 = vst.msk [vmem:[%s363 + $0x128] sm:$0xff] %vm489, %v629
        %649 = vst [vmem:[%s363 + $0x130] sm:$0xff] %v598
        %650 = vst.msk [vmem:[%s363 + $0x138] sm:$0xff] %vm489, %v630
        %651 = vst [vmem:[%s363 + $0x140] sm:$0xff] %v599
        %652 = vst.msk [vmem:[%s363 + $0x148] sm:$0xff] %vm489, %v631
        %653 = vst [vmem:[%s363 + $0x150] sm:$0xff] %v600
        %654 = vst.msk [vmem:[%s363 + $0x158] sm:$0xff] %vm489, %v632
        %655 = vst [vmem:[%s363 + $0x160] sm:$0xff] %v601
        %656 = vst.msk [vmem:[%s363 + $0x168] sm:$0xff] %vm489, %v633
        %657 = vst [vmem:[%s363 + $0x170] sm:$0xff] %v602
        %658 = vst.msk [vmem:[%s363 + $0x178] sm:$0xff] %vm489, %v634
        %659 = vst [vmem:[%s363 + $0x180] sm:$0xff] %v603
        %660 = vst.msk [vmem:[%s363 + $0x188] sm:$0xff] %vm489, %v635
        %661 = vst [vmem:[%s363 + $0x190] sm:$0xff] %v604
        %662 = vst.msk [vmem:[%s363 + $0x198] sm:$0xff] %vm489, %v636
        %663 = vst [vmem:[%s363 + $0x1a0] sm:$0xff] %v605
        %664 = vst.msk [vmem:[%s363 + $0x1a8] sm:$0xff] %vm489, %v637
        %665 = vst [vmem:[%s363 + $0x1b0] sm:$0xff] %v606
        %666 = vst.msk [vmem:[%s363 + $0x1b8] sm:$0xff] %vm489, %v638
        %667 = vst [vmem:[%s363 + $0x1c0] sm:$0xff] %v607
        %668 = vst.msk [vmem:[%s363 + $0x1c8] sm:$0xff] %vm489, %v639
        %669 = vst [vmem:[%s363 + $0x1d0] sm:$0xff] %v608
        %670 = vst.msk [vmem:[%s363 + $0x1d8] sm:$0xff] %vm489, %v640
        %671 = vst [vmem:[%s363 + $0x1e0] sm:$0xff] %v609
        %672 = vst.msk [vmem:[%s363 + $0x1e8] sm:$0xff] %vm489, %v641
        %673 = vst [vmem:[%s363 + $0x1f0] sm:$0xff] %v610
        %674 = vst.msk [vmem:[%s363 + $0x1f8] sm:$0xff] %vm489, %v642
        %s675 = sadd.s32 %s366, 256
        %s676 = sshra.s32 %s675, 7
        %s677 = sand.u32 %s675, 127
        %s678 = scalar_lea.vmem %s0, %s676
        %v679 = vld [vmem:[%s678] sm:$0x1]
        %v680 = vld [vmem:[%s320 + $0x10] sm:$0xff]
        %v681 = vld [vmem:[%s320 + $0x28] sm:$0xff]
        %v682 = vld [vmem:[%s320 + $0x40] sm:$0xff]
        %v683 = vld [vmem:[%s320 + $0x58] sm:$0xff]
        %v684 = vld [vmem:[%s320 + $0x70] sm:$0xff]
        %v685 = vld [vmem:[%s320 + $0x88] sm:$0xff]
        %v686 = vld [vmem:[%s320 + $0xa0] sm:$0xff]
        %v687 = vld [vmem:[%s320 + $0xb8] sm:$0xff]
        %v688 = vld [vmem:[%s320 + $0xd0] sm:$0xff]
        %v689 = vld [vmem:[%s320 + $0xe8] sm:$0xff]
        %v690 = vld [vmem:[%s320 + $0x100] sm:$0xff]
        %v691 = vld [vmem:[%s320 + $0x118] sm:$0xff]
        %v692 = vld [vmem:[%s320 + $0x130] sm:$0xff]
        %v693 = vld [vmem:[%s320 + $0x148] sm:$0xff]
        %v694 = vld [vmem:[%s320 + $0x160] sm:$0xff]
        %v695 = vld [vmem:[%s320 + $0x178] sm:$0xff]
        %v696 = vld [vmem:[%s320 + $0x190] sm:$0xff]
        %v697 = vld [vmem:[%s320 + $0x1a8] sm:$0xff]
        %v698 = vld [vmem:[%s320 + $0x1c0] sm:$0xff]
        %v699 = vld [vmem:[%s320 + $0x1d8] sm:$0xff]
        %v700 = vld [vmem:[%s320 + $0x1f0] sm:$0xff]
        %v701 = vld [vmem:[%s320 + $0x208] sm:$0xff]
        %v702 = vld [vmem:[%s320 + $0x220] sm:$0xff]
        %v703 = vld [vmem:[%s320 + $0x238] sm:$0xff]
        %v704 = vld [vmem:[%s320 + $0x250] sm:$0xf]
        %v706 = vperm.slane %v679, 0
        %v708 = vmul.f32 %v680, %v706
        %v709 = vmul.f32 %v681, %v706
        %v710 = vmul.f32 %v682, %v706
        %v711 = vmul.f32 %v683, %v706
        %v712 = vmul.f32 %v684, %v706
        %v713 = vmul.f32 %v685, %v706
        %v714 = vmul.f32 %v686, %v706
        %v715 = vmul.f32 %v687, %v706
        %v716 = vmul.f32 %v688, %v706
        %v717 = vmul.f32 %v689, %v706
        %v718 = vmul.f32 %v690, %v706
        %v719 = vmul.f32 %v691, %v706
        %v720 = vmul.f32 %v692, %v706
        %v721 = vmul.f32 %v693, %v706
        %v722 = vmul.f32 %v694, %v706
        %v723 = vmul.f32 %v695, %v706
        %v724 = vmul.f32 %v696, %v706
        %v725 = vmul.f32 %v697, %v706
        %v726 = vmul.f32 %v698, %v706
        %v727 = vmul.f32 %v699, %v706
        %v728 = vmul.f32 %v700, %v706
        %v729 = vmul.f32 %v701, %v706
        %v730 = vmul.f32 %v702, %v706
        %v731 = vmul.f32 %v703, %v706
        %v732 = vmul.f32 %v704, %v706
        %733 = vxpose.xlu0.b32.start [1/16] %v708, 128
        %734 = vxpose.xlu0.b32.cont [2/16] %v709, 128
        %735 = vxpose.xlu0.b32.cont [3/16] %v710, 128
        %736 = vxpose.xlu0.b32.cont [4/16] %v711, 128
        %737 = vxpose.xlu0.b32.cont [5/16] %v712, 128
        %738 = vxpose.xlu0.b32.cont [6/16] %v713, 128
        %739 = vxpose.xlu0.b32.cont [7/16] %v714, 128
        %740 = vxpose.xlu0.b32.cont [8/16] %v715, 128
        %741 = vxpose.xlu0.b32.cont [9/16] %v716, 128
        %742 = vxpose.xlu0.b32.cont [10/16] %v717, 128
        %743 = vxpose.xlu0.b32.cont [11/16] %v718, 128
        %744 = vxpose.xlu0.b32.cont [12/16] %v719, 128
        %745 = vxpose.xlu0.b32.cont [13/16] %v720, 128
        %746 = vxpose.xlu0.b32.cont [14/16] %v721, 128
        %747 = vxpose.xlu0.b32.cont [15/16] %v722, 128
        %748 = vxpose.xlu0.b32.end [16/16] %v723, 128
        %v749 = vpop.trf.xlu0
        %v750 = vpop.trf.xlu0
        %v751 = vpop.trf.xlu0
        %v752 = vpop.trf.xlu0
        %v753 = vpop.trf.xlu0
        %v754 = vpop.trf.xlu0
        %v755 = vpop.trf.xlu0
        %v756 = vpop.trf.xlu0
        %v757 = vpop.trf.xlu0
        %v758 = vpop.trf.xlu0
        %v759 = vpop.trf.xlu0
        %v760 = vpop.trf.xlu0
        %v761 = vpop.trf.xlu0
        %v762 = vpop.trf.xlu0
        %v763 = vpop.trf.xlu0
        %v764 = vpop.trf.xlu0
        %765 = vxpose.xlu0.b32.start [1/16] %v724, 128
        %766 = vxpose.xlu0.b32.cont [2/16] %v725, 128
        %767 = vxpose.xlu0.b32.cont [3/16] %v726, 128
        %768 = vxpose.xlu0.b32.cont [4/16] %v727, 128
        %769 = vxpose.xlu0.b32.cont [5/16] %v728, 128
        %770 = vxpose.xlu0.b32.cont [6/16] %v729, 128
        %771 = vxpose.xlu0.b32.cont [7/16] %v730, 128
        %772 = vxpose.xlu0.b32.cont [8/16] %v731, 128
        %773 = vxpose.xlu0.b32.cont [9/16] %v732, 128
        %774 = vxpose.xlu0.b32.cont [10/16] 0.0, 128
        %775 = vxpose.xlu0.b32.cont [11/16] 0.0, 128
        %776 = vxpose.xlu0.b32.cont [12/16] 0.0, 128
        %777 = vxpose.xlu0.b32.cont [13/16] 0.0, 128
        %778 = vxpose.xlu0.b32.cont [14/16] 0.0, 128
        %779 = vxpose.xlu0.b32.cont [15/16] 0.0, 128
        %780 = vxpose.xlu0.b32.end [16/16] 0.0, 128
        %v781 = vpop.trf.xlu0
        %v782 = vpop.trf.xlu0
        %v783 = vpop.trf.xlu0
        %v784 = vpop.trf.xlu0
        %v785 = vpop.trf.xlu0
        %v786 = vpop.trf.xlu0
        %v787 = vpop.trf.xlu0
        %v788 = vpop.trf.xlu0
        %v789 = vpop.trf.xlu0
        %v790 = vpop.trf.xlu0
        %v791 = vpop.trf.xlu0
        %v792 = vpop.trf.xlu0
        %v793 = vpop.trf.xlu0
        %v794 = vpop.trf.xlu0
        %v795 = vpop.trf.xlu0
        %v796 = vpop.trf.xlu0
        %797 = vst [vmem:[%s363 + $0x200] sm:$0xff] %v749
        %798 = vst.msk [vmem:[%s363 + $0x208] sm:$0xff] %vm489, %v781
        %799 = vst [vmem:[%s363 + $0x210] sm:$0xff] %v750
        %800 = vst.msk [vmem:[%s363 + $0x218] sm:$0xff] %vm489, %v782
        %801 = vst [vmem:[%s363 + $0x220] sm:$0xff] %v751
        %802 = vst.msk [vmem:[%s363 + $0x228] sm:$0xff] %vm489, %v783
        %803 = vst [vmem:[%s363 + $0x230] sm:$0xff] %v752
        %804 = vst.msk [vmem:[%s363 + $0x238] sm:$0xff] %vm489, %v784
        %805 = vst [vmem:[%s363 + $0x240] sm:$0xff] %v753
        %806 = vst.msk [vmem:[%s363 + $0x248] sm:$0xff] %vm489, %v785
        %807 = vst [vmem:[%s363 + $0x250] sm:$0xff] %v754
        %808 = vst.msk [vmem:[%s363 + $0x258] sm:$0xff] %vm489, %v786
        %809 = vst [vmem:[%s363 + $0x260] sm:$0xff] %v755
        %810 = vst.msk [vmem:[%s363 + $0x268] sm:$0xff] %vm489, %v787
        %811 = vst [vmem:[%s363 + $0x270] sm:$0xff] %v756
        %812 = vst.msk [vmem:[%s363 + $0x278] sm:$0xff] %vm489, %v788
        %813 = vst [vmem:[%s363 + $0x280] sm:$0xff] %v757
        %814 = vst.msk [vmem:[%s363 + $0x288] sm:$0xff] %vm489, %v789
        %815 = vst [vmem:[%s363 + $0x290] sm:$0xff] %v758
        %816 = vst.msk [vmem:[%s363 + $0x298] sm:$0xff] %vm489, %v790
        %817 = vst [vmem:[%s363 + $0x2a0] sm:$0xff] %v759
        %818 = vst.msk [vmem:[%s363 + $0x2a8] sm:$0xff] %vm489, %v791
        %819 = vst [vmem:[%s363 + $0x2b0] sm:$0xff] %v760
        %820 = vst.msk [vmem:[%s363 + $0x2b8] sm:$0xff] %vm489, %v792
        %821 = vst [vmem:[%s363 + $0x2c0] sm:$0xff] %v761
        %822 = vst.msk [vmem:[%s363 + $0x2c8] sm:$0xff] %vm489, %v793
        %823 = vst [vmem:[%s363 + $0x2d0] sm:$0xff] %v762
        %824 = vst.msk [vmem:[%s363 + $0x2d8] sm:$0xff] %vm489, %v794
        %825 = vst [vmem:[%s363 + $0x2e0] sm:$0xff] %v763
        %826 = vst.msk [vmem:[%s363 + $0x2e8] sm:$0xff] %vm489, %v795
        %827 = vst [vmem:[%s363 + $0x2f0] sm:$0xff] %v764
        %828 = vst.msk [vmem:[%s363 + $0x2f8] sm:$0xff] %vm489, %v796
        %s829 = smul.u32 48, %s19
        %s830 = smul.u32 2, %s20
        %p831 = scmp.lt.s32.totalorder %s18, 0
        %s832 = scalar_select %p831, %s18, 0
        %p833 = scmp.lt.s32.totalorder %s829, 95
        %s834 = scalar_select %p833, %s829, 95
        %p835 = scmp.lt.s32.totalorder %s830, 1
        %s836 = scalar_select %p835, %s830, 1
        %s837 = smul.addr %s834, 2
        %s838 = sadd.s32 %s836, %s837
        %s839 = smul.addr %s832, 192
        %s840 = sadd.s32 %s838, %s839
        %s841 = smul.addr %s840, 8
        %s842 = scalar_lea.vmem %s2, %s841
        // Predicated region
        $region52: #{tpu_custom_call.1} parent=46 // pred_check
          %p843 = pneg %p105
        $region53: #{tpu_custom_call.1} parent=46 // pred_check_branch
          %845 = sbr.rel (%p843) target = $region55
        $region54: #{tpu_custom_call.1} parent=46 // pred_region
          %s846 = smul.u32 48, %s19
          %s847 = smul.u32 2, %s20
        $region55: #{tpu_custom_call.1} parent=46 // pred_fallthru
          _
      $region47: #{tpu_custom_call.1} parent=5 // pred_fallthru
        _
      %p848 = scmp.le.s32.totalorder 2, %s8
      // Predicated region
      $region56: #{tpu_custom_call.1} parent=5 // pred_check
        %p849 = pneg %p848
      $region57: #{tpu_custom_call.1} parent=5 // pred_check_branch
        %851 = sbr.rel (%p849) target = $region59
      $region58: #{tpu_custom_call.1} parent=5 // pred_region
        %s852 = ssub.s32 %s8, 2
        // Predicated region
        $region60: #{tpu_custom_call.1} parent=58 // pred_check
          %p853 = pneg %p111
        $region61: #{tpu_custom_call.1} parent=58 // pred_check_branch
          %855 = sbr.rel (%p853) target = $region63
        $region62: #{tpu_custom_call.1} parent=58 // pred_region
          %s856 = smul.u32 48, %s22
          %s857 = smul.u32 2, %s23
          %p858 = scmp.lt.s32.totalorder %s21, 0
          %s859 = scalar_select %p858, %s21, 0
          %p860 = scmp.lt.s32.totalorder %s856, 95
          %s861 = scalar_select %p860, %s856, 95
          %p862 = scmp.lt.s32.totalorder %s857, 1
          %s863 = scalar_select %p862, %s857, 1
          %s864 = smul.addr %s861, 2
          %s865 = sadd.s32 %s863, %s864
          %s866 = smul.addr %s859, 192
          %s867 = sadd.s32 %s865, %s866
          %s868 = smul.addr %s867, 8
          %s869 = scalar_lea.vmem %s2, %s868
        $region63: #{tpu_custom_call.1} parent=58 // pred_fallthru
          _
      $region59: #{tpu_custom_call.1} parent=5 // pred_fallthru
        _
    $region6: #{tpu_custom_call.1} parent=1 // loop_footer
      %s12 = sadd.s32 1, %s8
    $region7: #{tpu_custom_call.1} parent=1 // loop_footer_branch
      %7 = sbr.rel target = $region3
    $region8: #{tpu_custom_call.1} parent=1 // loop_exit
      _

</llo_original>
